<compile_context>
chip_gen: v5e
topology: v5e:2x2
jax: 0.10.0
libtpu: 0.0.40
codegen_flags: <defaults>
</compile_context>

<pallas_src>
import jax
import jax.numpy as jnp
from jax.experimental import pallas as pl
from jax.experimental.pallas import tpu as pltpu


def _round_up(x, m):
    return ((x + m - 1) // m) * m


def _make_mlp_kernel(in_dim, h1, h2, out_dim, r2, r3, bias_col):
    """Kernel factory; layer widths / slab offsets are static ints baked in."""

    def kernel(x_ref, w_ref, out_ref):
        x = x_ref[...]                                     # (in_dim, tb)
        # layer 1: relu(W1^T @ x + b1)
        h = jnp.dot(w_ref[0:h1, 0:in_dim], x,
                    preferred_element_type=jnp.float32)
        h = jnp.maximum(h + w_ref[0:h1, bias_col:bias_col + 1], 0.0)
        # layer 2: relu(W2^T @ h + b2)
        h = jnp.dot(w_ref[r2:r2 + h2, 0:h1], h,
                    preferred_element_type=jnp.float32)
        h = jnp.maximum(h + w_ref[r2:r2 + h2, bias_col:bias_col + 1], 0.0)
        # output layer (target_std / target_mean already folded into W3'/b3')
        out_ref[...] = (jnp.dot(w_ref[r3:r3 + out_dim, 0:h2], h,
                                preferred_element_type=jnp.float32)
                        + w_ref[r3:r3 + out_dim, bias_col:bias_col + 1])

    return kernel


def one_step_dynamics_forward(state, action, params, target_mean, target_std,
                              *, batch_tile=4096):
    """Pallas implementation of OneStepDynamicsModel.forward(transform_out=True)."""
    assert state.ndim == 2 and action.ndim == 2, "not sequence of (s, a)!"

    w1, b1, w2, b2, w3, b3 = params
    state = state.astype(jnp.float32)
    action = action.astype(jnp.float32)

    B, state_dim = state.shape
    action_dim = action.shape[1]
    in_dim = state_dim + action_dim
    h1 = w1.shape[1]
    h2 = w2.shape[1]
    out_dim = w3.shape[1]

    # Fold the output affine (out * std + mean) into the last layer.
    tstd = target_std.astype(jnp.float32)
    tmean = target_mean.astype(jnp.float32)
    w3f = w3.astype(jnp.float32) * tstd[None, :]
    b3f = b3.astype(jnp.float32) * tstd + tmean

    # Pack transposed weights + bias columns into one slab (8-aligned row bases).
    r2 = _round_up(h1, 8)                  # start row of W2^T
    r3 = r2 + _round_up(h2, 8)             # start row of W3'^T
    R = r3 + _round_up(out_dim, 8)
    bias_col = max(in_dim, h1, h2)         # biases live in one extra column
    C = bias_col + 1
    slab = jnp.zeros((R, C), jnp.float32)
    slab = slab.at[0:h1, 0:in_dim].set(w1.astype(jnp.float32).T)
    slab = slab.at[r2:r2 + h2, 0:h1].set(w2.astype(jnp.float32).T)
    slab = slab.at[r3:r3 + out_dim, 0:h2].set(w3f.T)
    slab = slab.at[0:h1, bias_col].set(b1.astype(jnp.float32))
    slab = slab.at[r2:r2 + h2, bias_col].set(b2.astype(jnp.float32))
    slab = slab.at[r3:r3 + out_dim, bias_col].set(b3f)

    # Feature-major input: one cheap XLA concat + transpose (batch -> lanes).
    x = jnp.concatenate([state, action], axis=-1).T        # (in_dim, B)

    # Batch tile on the lane axis: multiple of 128 (or == B for tiny batches).
    # For B > 256 we always get >= 2 grid steps so "parallel" semantics can use
    # both v7x TensorCores; on v5e/v6e the large tile minimizes step overhead.
    if B <= 256:
        tb = B
    else:
        tb = min(_round_up(batch_tile, 128), _round_up(pl.cdiv(B, 2), 128))
    grid = (pl.cdiv(B, tb),)

    kernel = _make_mlp_kernel(in_dim, h1, h2, out_dim, r2, r3, bias_col)

    out_t = pl.pallas_call(
        kernel,
        out_shape=jax.ShapeDtypeStruct((out_dim, B), jnp.float32),
        grid=grid,
        in_specs=[
            # batch-tiled activations (lane-dense)
            pl.BlockSpec((in_dim, tb), lambda i: (0, i)),
            # weight/bias slab: same block every step -> VMEM-resident
            pl.BlockSpec((R, C), lambda i: (0, 0)),
        ],
        out_specs=pl.BlockSpec((out_dim, tb), lambda i: (0, i)),
        compiler_params=pltpu.CompilerParams(
            dimension_semantics=("parallel",)),
    )(x, slab)

    return out_t.T, None   # (out, extras) — extras is None in non-probabilistic mode


def _reference_forward(state, action, params, target_mean, target_std):
    sa = jnp.concatenate([state, action], axis=-1)
    w1, b1, w2, b2, w3, b3 = params
    h = jnp.maximum(sa @ w1 + b1, 0.0)
    h = jnp.maximum(h @ w2 + b2, 0.0)
    o = h @ w3 + b3
    return o * target_std + target_mean


def _init_linear(key, fan_in, fan_out):
    # PyTorch nn.Linear-style uniform(-1/sqrt(fan_in), 1/sqrt(fan_in)) init,
    # deterministic from the JAX key (synthetic weights, no checkpoint load).
    kw, kb = jax.random.split(key)
    bound = 1.0 / jnp.sqrt(jnp.float32(fan_in))
    w = jax.random.uniform(kw, (fan_in, fan_out), jnp.float32, -bound, bound)
    b = jax.random.uniform(kb, (fan_out,), jnp.float32, -bound, bound)
    return w, b


if __name__ == "__main__":
    # Shapes consistent with the module: state_dim=12, action_dim=4,
    # hidden_sizes=(32, 32), probabilistic=False.
    state_dim, action_dim = 12, 4
    hidden_sizes = (32, 32)

    key = jax.random.PRNGKey(0)
    ks = jax.random.split(key, 10)

    # net = mlp(state_dim + action_dim, hidden_sizes, state_dim, relu)
    w1, b1 = _init_linear(ks[2], state_dim + action_dim, hidden_sizes[0])
    w2, b2 = _init_linear(ks[3], hidden_sizes[0], hidden_sizes[1])
    w3, b3 = _init_linear(ks[4], hidden_sizes[1], state_dim)
    params = (w1, b1, w2, b2, w3, b3)

    # transformations[-2:] = (target_mean, target_std)
    target_mean = jax.random.normal(ks[5], (state_dim,), jnp.float32)
    target_std = jnp.abs(jax.random.normal(ks[6], (state_dim,), jnp.float32)) + 0.5

    # --- small case (B=8, single full block, grid=(1,)) ---
    B_small = 8
    state_s = jax.random.normal(ks[0], (B_small, state_dim), jnp.float32)
    action_s = jax.random.normal(ks[1], (B_small, action_dim), jnp.float32)
    out_s, extras = one_step_dynamics_forward(state_s, action_s, params,
                                              target_mean, target_std)
    out_s = jax.block_until_ready(out_s)
    ref_s = _reference_forward(state_s, action_s, params, target_mean, target_std)
    assert out_s.shape == (B_small, state_dim)
    assert extras is None
    assert jnp.allclose(out_s, ref_s, atol=1e-4, rtol=1e-4), "small-batch mismatch"

    # --- batched rollout case (B=1000 -> tb=512, grid=(2,), ragged last block) ---
    B_big = 1000
    state_b = jax.random.normal(ks[7], (B_big, state_dim), jnp.float32)
    action_b = jax.random.normal(ks[8], (B_big, action_dim), jnp.float32)
    out_b, _ = one_step_dynamics_forward(state_b, action_b, params,
                                         target_mean, target_std)
    out_b = jax.block_until_ready(out_b)
    ref_b = _reference_forward(state_b, action_b, params, target_mean, target_std)
    assert out_b.shape == (B_big, state_dim)
    assert jnp.allclose(out_b, ref_b, atol=1e-4, rtol=1e-4), "big-batch mismatch"

    print("KERNEL_OK")
</pallas_src>

<mosaic_0001>
module attributes {stable_mosaic.version = 11 : i64} {
  func.func @kernel(%arg0: i32, %arg1: memref<16x8xf32, #tpu.memory_space<vmem>>, %arg2: memref<80x33xf32, #tpu.memory_space<vmem>>, %arg3: memref<12x8xf32, #tpu.memory_space<vmem>>) attributes {dimension_semantics = [#tpu.dimension_semantics<parallel>], iteration_bounds = array<i64: 1>, scalar_prefetch = 0 : i64, scratch_operands = 0 : i64, tpu.core_type = #tpu.core_type<tc>, window_params = [{transform_indices = @transform_0, window_bounds = array<i64: 16, 8>}, {pipeline_mode = #tpu.pipeline_mode<synchronous>, transform_indices = @transform_1, window_bounds = array<i64: 80, 33>}, {transform_indices = @transform_2, window_bounds = array<i64: 12, 8>}]} {
    %c0 = arith.constant 0 : index
    %c0_0 = arith.constant 0 : index
    %0 = vector.load %arg1[%c0, %c0_0] : memref<16x8xf32, #tpu.memory_space<vmem>>, vector<16x8xf32>
    %c0_1 = arith.constant 0 : index
    %c0_2 = arith.constant 0 : index
    %1 = vector.load %arg2[%c0_1, %c0_2] : memref<80x33xf32, #tpu.memory_space<vmem>>, vector<32x16xf32>
    %cst = arith.constant dense<0.000000e+00> : vector<32x8xf32>
    %2 = tpu.matmul %1, %0, %cst {dimension_numbers = #tpu.dot_dimension_numbers<[1], [0], [0], [1], [0, 0, 1, 1], [], []>} : vector<32x16xf32>, vector<16x8xf32>, vector<32x8xf32> -> vector<32x8xf32>
    %c0_3 = arith.constant 0 : index
    %c32 = arith.constant 32 : index
    %3 = vector.load %arg2[%c0_3, %c32] : memref<80x33xf32, #tpu.memory_space<vmem>>, vector<32x1xf32>
    %4 = vector.broadcast %3 : vector<32x1xf32> to vector<32x8xf32>
    %5 = arith.addf %2, %4 : vector<32x8xf32>
    %cst_4 = arith.constant 0.000000e+00 : f32
    %6 = vector.broadcast %cst_4 : f32 to vector<32x8xf32>
    %7 = arith.maximumf %5, %6 : vector<32x8xf32>
    %c32_5 = arith.constant 32 : index
    %c0_6 = arith.constant 0 : index
    %8 = vector.load %arg2[%c32_5, %c0_6] : memref<80x33xf32, #tpu.memory_space<vmem>>, vector<32x32xf32>
    %cst_7 = arith.constant dense<0.000000e+00> : vector<32x8xf32>
    %9 = tpu.matmul %8, %7, %cst_7 {dimension_numbers = #tpu.dot_dimension_numbers<[1], [0], [0], [1], [0, 0, 1, 1], [], []>} : vector<32x32xf32>, vector<32x8xf32>, vector<32x8xf32> -> vector<32x8xf32>
    %c32_8 = arith.constant 32 : index
    %c32_9 = arith.constant 32 : index
    %10 = vector.load %arg2[%c32_8, %c32_9] : memref<80x33xf32, #tpu.memory_space<vmem>>, vector<32x1xf32>
    %11 = vector.broadcast %10 : vector<32x1xf32> to vector<32x8xf32>
    %12 = arith.addf %9, %11 : vector<32x8xf32>
    %cst_10 = arith.constant 0.000000e+00 : f32
    %13 = vector.broadcast %cst_10 : f32 to vector<32x8xf32>
    %14 = arith.maximumf %12, %13 : vector<32x8xf32>
    %c64 = arith.constant 64 : index
    %c0_11 = arith.constant 0 : index
    %15 = vector.load %arg2[%c64, %c0_11] : memref<80x33xf32, #tpu.memory_space<vmem>>, vector<12x32xf32>
    %cst_12 = arith.constant dense<0.000000e+00> : vector<12x8xf32>
    %16 = tpu.matmul %15, %14, %cst_12 {dimension_numbers = #tpu.dot_dimension_numbers<[1], [0], [0], [1], [0, 0, 1, 1], [], []>} : vector<12x32xf32>, vector<32x8xf32>, vector<12x8xf32> -> vector<12x8xf32>
    %c64_13 = arith.constant 64 : index
    %c32_14 = arith.constant 32 : index
    %17 = vector.load %arg2[%c64_13, %c32_14] : memref<80x33xf32, #tpu.memory_space<vmem>>, vector<12x1xf32>
    %18 = vector.broadcast %17 : vector<12x1xf32> to vector<12x8xf32>
    %19 = arith.addf %16, %18 : vector<12x8xf32>
    %c0_15 = arith.constant 0 : index
    %c0_16 = arith.constant 0 : index
    %20 = vector.load %arg3[%c0_15, %c0_16] : memref<12x8xf32, #tpu.memory_space<vmem>>, vector<12x8xf32>
    tpu.vector_store %arg3[%c0_15, %c0_16], %19 {strides = array<i32>} : memref<12x8xf32, #tpu.memory_space<vmem>>, vector<12x8xf32>,
    return
  }
  func.func @transform_0(%arg0: i32) -> (i32, i32) {
    %c0_i32 = arith.constant 0 : i32
    %c0_i32_0 = arith.constant 0 : i32
    return %c0_i32, %arg0 : i32, i32
  }
  func.func @transform_1(%arg0: i32) -> (i32, i32) {
    %c0_i32 = arith.constant 0 : i32
    %c0_i32_0 = arith.constant 0 : i32
    %c0_i32_1 = arith.constant 0 : i32
    return %c0_i32, %c0_i32_0 : i32, i32
  }
  func.func @transform_2(%arg0: i32) -> (i32, i32) {
    %c0_i32 = arith.constant 0 : i32
    %c0_i32_0 = arith.constant 0 : i32
    return %c0_i32, %arg0 : i32, i32
  }
}

</mosaic_0001>

<llo_original>
// kernel: tpu_custom_call.1
$region0: #{tpu_custom_call.1}
  #allocation0 [shape = 'u32[]', space=smem, size = 0x4, offset = 0x4, fixed_abs, tag = 'smem constant byte address 0x4 - core index']
  #allocation1 [shape = 'u32[72,128]{1,0:T(1,128)}', space=vmem, size = 0x9000, scoped, tag = 'internal scratch']
  %s0 = inlined_call_operand.vmem [shape: f32[16,8], index: 0, kind: input, shape index: {}]
  %s1 = inlined_call_operand.vmem [shape: f32[80,33], index: 1, kind: input, shape index: {}]
  %s2 = inlined_call_operand.vmem [shape: f32[12,8], index: 2, kind: output, shape index: {}]
  %s3 = sld [smem:[#allocation0]]
  $region18: #{tpu_custom_call.1} parent=0
    _
  %s5 = ssub.s32 1, %s3
  %s6 = scalar_select 0, %s5, %s3
  // Predicated region
  $region2: #{tpu_custom_call.1} parent=0 // pred_check
    _
  $region3: #{tpu_custom_call.1} parent=0 // pred_check_branch
    %8 = sbr.rel (0) target = $region5
  $region4: #{tpu_custom_call.1} parent=0 // pred_region
    _
  $region5: #{tpu_custom_call.1} parent=0 // pred_fallthru
    _
  // Predicated region
  $region6: #{tpu_custom_call.1} parent=0 // pred_check
    _
  $region7: #{tpu_custom_call.1} parent=0 // pred_check_branch
    %10 = sbr.rel (0) target = $region9
  $region8: #{tpu_custom_call.1} parent=0 // pred_region
    _
  $region9: #{tpu_custom_call.1} parent=0 // pred_fallthru
    _
  %v11 = vld [vmem:[%s0] sm:$0xff]
  %v12 = vld [vmem:[%s0 + $0x8] sm:$0xff]
  %v13 = vld [vmem:[%s1] sm:$0xff]
  %v14 = vld [vmem:[%s1 + $0x8] sm:$0xff]
  %v15 = vld [vmem:[%s1 + $0x10] sm:$0xff]
  %v16 = vld [vmem:[%s1 + $0x18] sm:$0xff]
  %18 = vset.pattern.permute.xlu0 32
  %19 = vperm.xlu0 %18, %v13
  %v20 = vpop.permute.xlu0 %19
  %23 = vset.pattern.permute.xlu0 32
  %24 = vperm.xlu0 %23, %v14
  %v25 = vpop.permute.xlu0 %24
  %28 = vset.pattern.permute.xlu0 32
  %29 = vperm.xlu0 %28, %v15
  %v30 = vpop.permute.xlu0 %29
  %33 = vset.pattern.permute.xlu0 32
  %34 = vperm.xlu0 %33, %v16
  %v35 = vpop.permute.xlu0 %34
  %vm37 = vcmask 130048
  %v38 = vsel %vm37, %v13, 0
  %v40 = vsel %vm37, %v14, 0
  %v42 = vsel %vm37, %v15, 0
  %v44 = vsel %vm37, %v16, 0
  %46 = vmatpush.msra.mxu0 0.0
  %47 = vmatpush.msra.mxu0 0.0
  %48 = vmatpush.msra.mxu0 0.0
  %49 = vmatpush.msra.mxu0 0.0
  %50 = vmatpush.msra.mxu0 0.0
  %51 = vmatpush.msra.mxu0 0.0
  %52 = vmatpush.msra.mxu0 0.0
  %53 = vmatpush.msra.mxu0 0.0
  %54 = vmatpush.msra.mxu0 0.0
  %55 = vmatpush.msra.mxu0 0.0
  %56 = vmatpush.msra.mxu0 0.0
  %57 = vmatpush.msra.mxu0 0.0
  %58 = vmatpush.msra.mxu0 0.0
  %59 = vmatpush.msra.mxu0 0.0
  %60 = vmatpush.msra.mxu0 %v12
  %61 = vmatpush.msra.mxu0 %v11
  %62 = vmatmul.f32.gmra.mxu0 %v38
  %v63 = vpop.f32.mrf.mxu0
  %v64 = vadd.f32 %v20, %v63
  %65 = vmatmul.f32.gmra.mxu0 %v40
  %v66 = vpop.f32.mrf.mxu0
  %v67 = vadd.f32 %v25, %v66
  %68 = vmatmul.f32.gmra.mxu0 %v42
  %v69 = vpop.f32.mrf.mxu0
  %v70 = vadd.f32 %v30, %v69
  %71 = vmatmul.f32.gmra.mxu0 %v44
  %v72 = vpop.f32.mrf.mxu0
  %v73 = vadd.f32 %v35, %v72
  %74 = vdwg.mxu0
  %v75 = vmax.f32 %v64, 0.0
  %v76 = vmax.f32 %v67, 0.0
  %v77 = vmax.f32 %v70, 0.0
  %v78 = vmax.f32 %v73, 0.0
  %v79 = vld [vmem:[%s1 + $0x20] sm:$0xff]
  %v80 = vld [vmem:[%s1 + $0x28] sm:$0xff]
  %v81 = vld [vmem:[%s1 + $0x30] sm:$0xff]
  %v82 = vld [vmem:[%s1 + $0x38] sm:$0xff]
  %84 = vset.pattern.permute.xlu0 32
  %85 = vperm.xlu0 %84, %v79
  %v86 = vpop.permute.xlu0 %85
  %89 = vset.pattern.permute.xlu0 32
  %90 = vperm.xlu0 %89, %v80
  %v91 = vpop.permute.xlu0 %90
  %94 = vset.pattern.permute.xlu0 32
  %95 = vperm.xlu0 %94, %v81
  %v96 = vpop.permute.xlu0 %95
  %99 = vset.pattern.permute.xlu0 32
  %100 = vperm.xlu0 %99, %v82
  %v101 = vpop.permute.xlu0 %100
  %vm103 = vcmask 261120
  %v104 = vsel %vm103, %v79, 0
  %v106 = vsel %vm103, %v80, 0
  %v108 = vsel %vm103, %v81, 0
  %v110 = vsel %vm103, %v82, 0
  %112 = vmatpush.msra.mxu0 0.0
  %113 = vmatpush.msra.mxu0 0.0
  %114 = vmatpush.msra.mxu0 0.0
  %115 = vmatpush.msra.mxu0 0.0
  %116 = vmatpush.msra.mxu0 0.0
  %117 = vmatpush.msra.mxu0 0.0
  %118 = vmatpush.msra.mxu0 0.0
  %119 = vmatpush.msra.mxu0 0.0
  %120 = vmatpush.msra.mxu0 0.0
  %121 = vmatpush.msra.mxu0 0.0
  %122 = vmatpush.msra.mxu0 0.0
  %123 = vmatpush.msra.mxu0 0.0
  %124 = vmatpush.msra.mxu0 %v78
  %125 = vmatpush.msra.mxu0 %v77
  %126 = vmatpush.msra.mxu0 %v76
  %127 = vmatpush.msra.mxu0 %v75
  %128 = vmatmul.f32.gmra.mxu0 %v104
  %v129 = vpop.f32.mrf.mxu0
  %v130 = vadd.f32 %v86, %v129
  %131 = vmatmul.f32.gmra.mxu0 %v106
  %v132 = vpop.f32.mrf.mxu0
  %v133 = vadd.f32 %v91, %v132
  %134 = vmatmul.f32.gmra.mxu0 %v108
  %v135 = vpop.f32.mrf.mxu0
  %v136 = vadd.f32 %v96, %v135
  %137 = vmatmul.f32.gmra.mxu0 %v110
  %v138 = vpop.f32.mrf.mxu0
  %v139 = vadd.f32 %v101, %v138
  %140 = vdwg.mxu0
  %v141 = vmax.f32 %v130, 0.0
  %v142 = vmax.f32 %v133, 0.0
  %v143 = vmax.f32 %v136, 0.0
  %v144 = vmax.f32 %v139, 0.0
  %v145 = vld [vmem:[%s1 + $0x40] sm:$0xff]
  %v146 = vld [vmem:[%s1 + $0x48] sm:$0xf]
  %148 = vset.pattern.permute.xlu0 32
  %149 = vperm.xlu0 %148, %v145
  %v150 = vpop.permute.xlu0 %149
  %153 = vset.pattern.permute.xlu0 32
  %154 = vperm.xlu0 %153, %v146
  %v155 = vpop.permute.xlu0 %154
  %v157 = vsel %vm103, %v145, 0
  %v159 = vsel %vm103, %v146, 0
  %161 = vmatpush.msra.mxu0 0.0
  %162 = vmatpush.msra.mxu0 0.0
  %163 = vmatpush.msra.mxu0 0.0
  %164 = vmatpush.msra.mxu0 0.0
  %165 = vmatpush.msra.mxu0 0.0
  %166 = vmatpush.msra.mxu0 0.0
  %167 = vmatpush.msra.mxu0 0.0
  %168 = vmatpush.msra.mxu0 0.0
  %169 = vmatpush.msra.mxu0 0.0
  %170 = vmatpush.msra.mxu0 0.0
  %171 = vmatpush.msra.mxu0 0.0
  %172 = vmatpush.msra.mxu0 0.0
  %173 = vmatpush.msra.mxu0 %v144
  %174 = vmatpush.msra.mxu0 %v143
  %175 = vmatpush.msra.mxu0 %v142
  %176 = vmatpush.msra.mxu0 %v141
  %177 = vmatmul.f32.gmra.mxu0 %v157
  %v178 = vpop.f32.mrf.mxu0
  %v179 = vadd.f32 %v150, %v178
  %180 = vmatmul.f32.gmra.mxu0 %v159
  %v181 = vpop.f32.mrf.mxu0
  %v182 = vadd.f32 %v155, %v181
  %183 = vdwg.mxu0
  %vm184 = vcmask 64512
  %185 = vst.msk [vmem:[%s2] sm:$0xff] %vm184, %v179
  %vm186 = vcmask 60416
  %187 = vst.msk [vmem:[%s2 + $0x8] sm:$0xf] %vm186, %v182
  // Predicated region
  $region10: #{tpu_custom_call.1} parent=0 // pred_check
    _
  $region11: #{tpu_custom_call.1} parent=0 // pred_check_branch
    %189 = sbr.rel (0) target = $region13
  $region12: #{tpu_custom_call.1} parent=0 // pred_region
    _
  $region13: #{tpu_custom_call.1} parent=0 // pred_fallthru
    _
  // Predicated region
  $region14: #{tpu_custom_call.1} parent=0 // pred_check
    _
  $region15: #{tpu_custom_call.1} parent=0 // pred_check_branch
    %191 = sbr.rel (0) target = $region17
  $region16: #{tpu_custom_call.1} parent=0 // pred_region
    _
  $region17: #{tpu_custom_call.1} parent=0 // pred_fallthru
    _

</llo_original>
